<compile_context>
chip_gen: v5e
topology: v5e:2x2
jax: 0.10.0
libtpu: 0.0.40
codegen_flags: <defaults>
</compile_context>

<pallas_src>
import functools

import jax
import jax.numpy as jnp
from jax import lax
from jax.experimental import pallas as pl
from jax.experimental.pallas import tpu as pltpu


# --------------------------------------------------------------------------
# helpers
# --------------------------------------------------------------------------

def _pick_tile(dim, candidates):
    """Largest candidate that evenly divides `dim`, else the full dim."""
    for c in candidates:
        if c <= dim and dim % c == 0:
            return c
    return dim


def _heads_per_group(num_heads, head_dim):
    """Smallest number of heads whose combined column width (hpg * head_dim)
    is a multiple of 128 lanes -> lane-dense DMA blocks and unmasked stores.
    (SAM: head_dim=64 -> 2 heads/group; ViT-H head_dim=80 -> 8 heads/group.)"""
    for hpg in range(1, num_heads + 1):
        if num_heads % hpg == 0 and (hpg * head_dim) % 128 == 0:
            return hpg
    return num_heads


# --------------------------------------------------------------------------
# single-pass tiled linear:  o = x @ w + b   (full-K blocks, bf16 MXU)
# --------------------------------------------------------------------------

def _linear_kernel(x_ref, w_ref, b_ref, o_ref):
    acc = jnp.dot(x_ref[...], w_ref[...], preferred_element_type=jnp.float32)
    o_ref[...] = (acc + b_ref[...].astype(jnp.float32)).astype(o_ref.dtype)


def pallas_linear(x2d, w, b, out_dtype=None):
    """x2d: (N, Cin) bf16, w: (Cin, Cout) bf16, b: (Cout,) f32 -> (N, Cout)."""
    n, cin = x2d.shape
    cout = w.shape[1]
    out_dtype = out_dtype if out_dtype is not None else x2d.dtype

    # Full-K single pass: no K grid axis, no accumulator scratch, each output
    # tile written exactly once.  Tiles are sized to stay under the scoped
    # VMEM defaults on every generation even double-buffered.
    tm = _pick_tile(n, (512, 256, 128))
    tn = _pick_tile(cout, (768, 512, 384, 256, 128))
    b2d = b.reshape(1, cout)

    return pl.pallas_call(
        _linear_kernel,
        out_shape=jax.ShapeDtypeStruct((n, cout), out_dtype),
        grid=(n // tm, cout // tn),
        in_specs=[
            pl.BlockSpec((tm, cin), lambda i, j: (i, 0)),
            pl.BlockSpec((cin, tn), lambda i, j: (0, j)),
            pl.BlockSpec((1, tn), lambda i, j: (0, j)),
        ],
        out_specs=pl.BlockSpec((tm, tn), lambda i, j: (i, j)),
        compiler_params=pltpu.CompilerParams(
            dimension_semantics=("parallel", "parallel"),
            vmem_limit_bytes=32 * 1024 * 1024),
    )(x2d, w, b2d)


# --------------------------------------------------------------------------
# flash-style attention core, head-group grid axis, reads q/k/v straight out
# of the (B, S, 3C) qkv buffer via column-block index_maps
# --------------------------------------------------------------------------

def _flash_attn_kernel(q_ref, k_ref, v_ref, o_ref, m_ref, l_ref, acc_ref,
                       *, heads_per_group, head_dim):
    """Blocks: q (1, tq, LG), k/v (1, tk, LG) where LG = heads_per_group*hd
    (a 128-lane-multiple column group).  Grid = (batch, head_group, q_tile,
    kv_tile); kv_tile is the reduction axis (last).  Online-softmax state per
    head of the group lives in VMEM scratch across kv steps.  q is pre-scaled
    (1/sqrt(head_dim) folded into the qkv weights)."""
    ki = pl.program_id(3)

    @pl.when(ki == 0)
    def _init():
        m_ref[...] = jnp.full_like(m_ref, -jnp.inf)
        l_ref[...] = jnp.zeros_like(l_ref)
        acc_ref[...] = jnp.zeros_like(acc_ref)

    # Small static loop over the heads of this 128-lane group (2 for SAM).
    for h in range(heads_per_group):
        c0 = h * head_dim
        q_h = q_ref[0, :, c0:c0 + head_dim]          # (tq, hd) bf16, scaled
        k_h = k_ref[0, :, c0:c0 + head_dim]          # (tk, hd) bf16
        v_h = v_ref[0, :, c0:c0 + head_dim]          # (tk, hd) bf16

        # NT matmul: contract last dims of both operands -> no k.T in-kernel.
        s = lax.dot_general(
            q_h, k_h,
            dimension_numbers=(((1,), (1,)), ((), ())),
            preferred_element_type=jnp.float32)      # (tq, tk) f32

        m_prev = m_ref[h]                            # (tq, 1)
        m_new = jnp.maximum(m_prev, jnp.max(s, axis=-1, keepdims=True))
        alpha = jnp.exp(m_prev - m_new)
        p = jnp.exp(s - m_new)                       # (tq, tk) f32
        # NOTE: jnp.sum here is an XLU reduction; if bundle dumps show the
        # XLU slot saturating (v6e/v7x), fold it into the MXU by augmenting
        # v with a ones column.
        l_ref[h] = alpha * l_ref[h] + jnp.sum(p, axis=-1, keepdims=True)
        acc_ref[h] = alpha * acc_ref[h] + jnp.dot(
            p.astype(v_h.dtype), v_h, preferred_element_type=jnp.float32)
        m_ref[h] = m_new

    @pl.when(ki == pl.num_programs(3) - 1)
    def _epilogue():
        # One normalization per output tile (EUP reciprocal), written into the
        # (tq, LG) output block in head-major column order -> output already
        # in (B, S, C) layout, no XLA transpose afterwards.
        for h in range(heads_per_group):
            c0 = h * head_dim
            inv_l = pl.reciprocal(l_ref[h], approx=True)
            o_ref[0, :, c0:c0 + head_dim] = (acc_ref[h] * inv_l).astype(o_ref.dtype)


def pallas_flash_attention(qkv, num_heads):
    """qkv: (B, S, 3*C) bf16 with columns ordered (tensor, head, head_dim).
    Returns attention output in (B, S, C) layout (head-major columns)."""
    B, S, three_c = qkv.shape
    C = three_c // 3
    hd = C // num_heads
    hpg = _heads_per_group(num_heads, hd)
    lg = hpg * hd                 # lane-group (column block) width, 128-multiple
    n_grp = C // lg

    # bf16 tiles: q/k/v/out blocks at (512, 128) are 128 KiB each; with
    # double-buffering plus f32 online-softmax scratch the kernel uses well
    # under the 16 MiB (v5e) / 32 MiB (v6e, v7x) scoped VMEM defaults.
    tq = _pick_tile(S, (512, 256, 128))
    tk = _pick_tile(S, (512, 256, 128))

    kern = functools.partial(_flash_attn_kernel,
                             heads_per_group=hpg, head_dim=hd)

    return pl.pallas_call(
        kern,
        out_shape=jax.ShapeDtypeStruct((B, S, C), qkv.dtype),
        grid=(B, n_grp, S // tq, S // tk),
        in_specs=[
            # Same (B, S, 3C) buffer passed three times; the last-dim block
            # index selects the (tensor, head-group) column slab -> the
            # tensor/head split is pure DMA addressing, no HBM reshuffle.
            pl.BlockSpec((1, tq, lg), lambda b, g, qi, ki: (b, qi, g)),
            pl.BlockSpec((1, tk, lg), lambda b, g, qi, ki: (b, ki, n_grp + g)),
            pl.BlockSpec((1, tk, lg), lambda b, g, qi, ki: (b, ki, 2 * n_grp + g)),
        ],
        out_specs=pl.BlockSpec((1, tq, lg), lambda b, g, qi, ki: (b, qi, g)),
        scratch_shapes=[
            pltpu.VMEM((hpg, tq, 1), jnp.float32),    # running max m
            pltpu.VMEM((hpg, tq, 1), jnp.float32),    # running sum l
            pltpu.VMEM((hpg, tq, hd), jnp.float32),   # f32 accumulator
        ],
        compiler_params=pltpu.CompilerParams(
            dimension_semantics=("parallel", "parallel", "parallel", "arbitrary"),
            vmem_limit_bytes=32 * 1024 * 1024),
    )(qkv, qkv, qkv)


# --------------------------------------------------------------------------
# module
# --------------------------------------------------------------------------

class AttentionPallas:
    """JAX/Pallas re-implementation of the PyTorch `Attention` module
    (use_rel_pos=False path)."""

    def __init__(self, dim, num_heads=8, qkv_bias=True, use_rel_pos=False,
                 key=None):
        assert dim % num_heads == 0, "dim must be divisible by num_heads"
        if use_rel_pos:
            # TODO(synk): add_decomposed_rel_pos not implemented in Pallas.
            raise NotImplementedError("use_rel_pos=True path not implemented")

        self.dim = dim
        self.num_heads = num_heads
        self.head_dim = dim // num_heads
        self.scale = self.head_dim ** (-0.5)

        if key is None:
            key = jax.random.PRNGKey(0)
        k1, k2, k3, k4 = jax.random.split(key, 4)
        # f32 master parameters (shapes from nn.Linear(dim, 3*dim),
        # nn.Linear(dim, dim)); stored as (in, out) so forward is x @ W + b.
        self.qkv_w = jax.random.normal(k1, (dim, 3 * dim), jnp.float32) * 0.05
        self.qkv_b = (jax.random.normal(k2, (3 * dim,), jnp.float32) * 0.05
                      if qkv_bias else jnp.zeros((3 * dim,), jnp.float32))
        self.proj_w = jax.random.normal(k3, (dim, dim), jnp.float32) * 0.05
        self.proj_b = jax.random.normal(k4, (dim,), jnp.float32) * 0.05

        # Fold the 1/sqrt(head_dim) softmax scale into the q columns of the
        # qkv projection (one-time), then cast the matmul operands to bf16
        # so the MXU runs at bf16 throughput (f32 accumulation in-kernel).
        col_scale = jnp.concatenate(
            [jnp.full((dim,), self.scale, jnp.float32),
             jnp.ones((2 * dim,), jnp.float32)])
        self.qkv_w_bf16 = (self.qkv_w * col_scale[None, :]).astype(jnp.bfloat16)
        self.qkv_b_scaled = self.qkv_b * col_scale           # bias stays f32
        self.proj_w_bf16 = self.proj_w.astype(jnp.bfloat16)

    def __call__(self, x):
        B, H, W, C = x.shape
        assert C == self.dim
        S = H * W

        # --- qkv projection (single-pass bf16 Pallas matmul, bf16 output) ---
        x2d = x.reshape(B * S, C).astype(jnp.bfloat16)               # free-ish
        qkv = pallas_linear(x2d, self.qkv_w_bf16, self.qkv_b_scaled,
                            out_dtype=jnp.bfloat16)
        qkv3 = qkv.reshape(B, S, 3 * C)                              # free

        # --- flash attention core (bf16 q/k/v, head-group grid axis,
        #     writes (B, S, C) bf16 directly -> no HBM transposes) ---
        o = pallas_flash_attention(qkv3, self.num_heads)             # (B, S, C)

        # --- output projection (bf16 matmul, f32 output) ---
        out = pallas_linear(o.reshape(B * S, C), self.proj_w_bf16,
                            self.proj_b, out_dtype=x.dtype)
        return out.reshape(B, H, W, C)


# --------------------------------------------------------------------------
# pure-JAX f32 reference (mirrors the PyTorch forward, unscaled weights)
# --------------------------------------------------------------------------

def reference_forward(mod: AttentionPallas, x):
    B, H, W, C = x.shape
    S = H * W
    nh, hd = mod.num_heads, mod.head_dim
    qkv = x.reshape(B * S, C) @ mod.qkv_w + mod.qkv_b
    qkv = qkv.reshape(B, S, 3, nh, hd)
    qkv = jnp.transpose(qkv, (2, 0, 3, 1, 4)).reshape(3, B * nh, S, hd)
    q, k, v = qkv[0], qkv[1], qkv[2]
    attn = (q * mod.scale) @ jnp.swapaxes(k, -2, -1)
    attn = jax.nn.softmax(attn, axis=-1)
    o = attn @ v
    o = o.reshape(B, nh, H, W, hd)
    o = jnp.transpose(o, (0, 2, 3, 1, 4)).reshape(B, H, W, C)
    return (o.reshape(B * S, C) @ mod.proj_w + mod.proj_b).reshape(B, H, W, C)


if __name__ == "__main__":
    key = jax.random.PRNGKey(0)
    kx, kp = jax.random.split(key)

    # Small but lane-aligned shapes (dim multiple of 128 keeps every column
    # block 128-lane dense, as in real SAM where dim = 768/1024/1280).
    B, H, W, dim, num_heads = 2, 8, 8, 128, 4
    x = jax.random.normal(kx, (B, H, W, dim), jnp.float32)

    mod = AttentionPallas(dim=dim, num_heads=num_heads, qkv_bias=True, key=kp)

    out = jax.block_until_ready(mod(x))
    ref = reference_forward(mod, x)
    assert out.shape == (B, H, W, dim)
    # bf16 MXU operands (+ approx softmax reciprocal) vs. an f32 reference:
    # errors are a few 1e-3 on O(0.3) outputs; 5e-2 tolerance is comfortable
    # while still catching structural/addressing bugs.
    assert jnp.allclose(out, ref, atol=5e-2, rtol=5e-2), "mismatch vs reference"

    print("KERNEL_OK")
</pallas_src>

<mosaic_0001>
module attributes {stable_mosaic.version = 11 : i64} {
  func.func @_linear_kernel(%arg0: i32, %arg1: i32, %arg2: memref<128x128xbf16, #tpu.memory_space<vmem>>, %arg3: memref<128x384xbf16, #tpu.memory_space<vmem>>, %arg4: memref<1x384xf32, #tpu.memory_space<vmem>>, %arg5: memref<128x384xbf16, #tpu.memory_space<vmem>>) attributes {dimension_semantics = [#tpu.dimension_semantics<parallel>, #tpu.dimension_semantics<parallel>], iteration_bounds = array<i64: 1, 1>, scalar_prefetch = 0 : i64, scratch_operands = 0 : i64, tpu.core_type = #tpu.core_type<tc>, window_params = [{transform_indices = @transform_0, window_bounds = array<i64: 128, 128>}, {transform_indices = @transform_1, window_bounds = array<i64: 128, 384>}, {transform_indices = @transform_2, window_bounds = array<i64: 1, 384>}, {transform_indices = @transform_3, window_bounds = array<i64: 128, 384>}]} {
    %c0 = arith.constant 0 : index
    %c0_0 = arith.constant 0 : index
    %0 = vector.load %arg2[%c0, %c0_0] : memref<128x128xbf16, #tpu.memory_space<vmem>>, vector<128x128xbf16>
    %c0_1 = arith.constant 0 : index
    %c0_2 = arith.constant 0 : index
    %1 = vector.load %arg3[%c0_1, %c0_2] : memref<128x384xbf16, #tpu.memory_space<vmem>>, vector<128x384xbf16>
    %cst = arith.constant dense<0.000000e+00> : vector<128x384xf32>
    %2 = tpu.matmul %0, %1, %cst {dimension_numbers = #tpu.dot_dimension_numbers<[1], [0], [0], [1], [0, 0, 1, 1], [], []>} : vector<128x128xbf16>, vector<128x384xbf16>, vector<128x384xf32> -> vector<128x384xf32>
    %c0_3 = arith.constant 0 : index
    %c0_4 = arith.constant 0 : index
    %3 = vector.load %arg4[%c0_3, %c0_4] : memref<1x384xf32, #tpu.memory_space<vmem>>, vector<1x384xf32>
    %4 = vector.broadcast %3 : vector<1x384xf32> to vector<128x384xf32>
    %5 = arith.addf %2, %4 : vector<128x384xf32>
    %6 = arith.truncf %5 : vector<128x384xf32> to vector<128x384xbf16>
    %c0_5 = arith.constant 0 : index
    %c0_6 = arith.constant 0 : index
    %7 = vector.load %arg5[%c0_5, %c0_6] : memref<128x384xbf16, #tpu.memory_space<vmem>>, vector<128x384xbf16>
    tpu.vector_store %arg5[%c0_5, %c0_6], %6 {strides = array<i32>} : memref<128x384xbf16, #tpu.memory_space<vmem>>, vector<128x384xbf16>,
    return
  }
  func.func @transform_0(%arg0: i32, %arg1: i32) -> (i32, i32) {
    %c0_i32 = arith.constant 0 : i32
    %c0_i32_0 = arith.constant 0 : i32
    return %arg0, %c0_i32 : i32, i32
  }
  func.func @transform_1(%arg0: i32, %arg1: i32) -> (i32, i32) {
    %c0_i32 = arith.constant 0 : i32
    %c0_i32_0 = arith.constant 0 : i32
    return %c0_i32, %arg1 : i32, i32
  }
  func.func @transform_2(%arg0: i32, %arg1: i32) -> (i32, i32) {
    %c0_i32 = arith.constant 0 : i32
    %c0_i32_0 = arith.constant 0 : i32
    return %c0_i32, %arg1 : i32, i32
  }
  func.func @transform_3(%arg0: i32, %arg1: i32) -> (i32, i32) {
    %c0_i32 = arith.constant 0 : i32
    return %arg0, %arg1 : i32, i32
  }
}

</mosaic_0001>

<llo_original>
// kernel: tpu_custom_call.1
$region0: #{tpu_custom_call.1}
  #allocation0 [shape = 'u32[]', space=smem, size = 0x4, offset = 0x4, fixed_abs, tag = 'smem constant byte address 0x4 - core index']
  #allocation1 [shape = 'u32[72,128]{1,0:T(1,128)}', space=vmem, size = 0x9000, scoped, tag = 'internal scratch']
  %s0 = inlined_call_operand.hbm [shape: bf16[128,128], index: 0, kind: input, shape index: {}]
  %s1 = inlined_call_operand.hbm [shape: bf16[128,384], index: 1, kind: input, shape index: {}]
  %s2 = inlined_call_operand.hbm [shape: f32[1,384], index: 2, kind: input, shape index: {}]
  %s3 = inlined_call_operand.hbm [shape: bf16[128,384], index: 3, kind: output, shape index: {}]
  %s4 = sld [smem:[#allocation0]]
  $region34: #{tpu_custom_call.1} parent=0
    _
  %s6 = ssub.s32 1, %s4
  %s7 = scalar_select 0, %s6, %s4
  $region1: #{tpu_custom_call.1} parent=0
    #allocation2 [shape = 'u8[32768]{0}', space=vmem, size = 0x8000, scoped, tag = 'input window, operand 0, single buffered']
    #allocation3 [shape = 's32[1]{0}', space=sflag, size = 0x4, scoped, tag = 'scoped memory for tpu_custom_call.1']
    #allocation4 [shape = 's32[1]{0}', space=sflag, size = 0x4, scoped, tag = 'scoped memory for tpu_custom_call.1']
    #allocation5 [shape = 'u8[98304]{0}', space=vmem, size = 0x18000, scoped, tag = 'input window, operand 1, single buffered']
    #allocation6 [shape = 's32[1]{0}', space=sflag, size = 0x4, scoped, tag = 'scoped memory for tpu_custom_call.1']
    #allocation7 [shape = 'u8[1536]{0}', space=vmem, size = 0x800, scoped, tag = 'input window, operand 2, single buffered']
    #allocation8 [shape = 'u8[98304]{0}', space=vmem, size = 0x18000, scoped, tag = 'output window, operand 0, single buffered']
    %8 = vsyncpa [#allocation3], 0
    %9 = vsyncpa [#allocation6], 0
    %10 = vsyncpa [#allocation4], 0
    // Predicated region
    $region2: #{tpu_custom_call.1} parent=1 // pred_check
      _
    $region3: #{tpu_custom_call.1} parent=1 // pred_check_branch
      %12 = sbr.rel (0) target = $region5
    $region4: #{tpu_custom_call.1} parent=1 // pred_region
      %14 = vsyncadd [#allocation3], 0
      %s15 = sshll.u32 %s0, 4
      %s16 = int_to_ptr.hbm [resolvable:$true] %s15
      %s17 = sshll.u32 [#allocation2], 4
      %s18 = int_to_ptr.vmem [resolvable:$true] %s17
      %23 = dma.hbm_to_vmem [thread:$0]  %s16, 1024, %s18, [#allocation3], 64, 64, 4
    $region5: #{tpu_custom_call.1} parent=1 // pred_fallthru
      _
    // Predicated region
    $region6: #{tpu_custom_call.1} parent=1 // pred_check
      _
    $region7: #{tpu_custom_call.1} parent=1 // pred_check_branch
      %25 = sbr.rel (0) target = $region9
    $region8: #{tpu_custom_call.1} parent=1 // pred_region
      %27 = vsyncadd [#allocation6], 0
      %s28 = sshll.u32 %s1, 4
      %s29 = int_to_ptr.hbm [resolvable:$true] %s28
      %s30 = sshll.u32 [#allocation5], 4
      %s31 = int_to_ptr.vmem [resolvable:$true] %s30
      %36 = dma.hbm_to_vmem [thread:$0]  %s29, 3072, %s31, [#allocation6], 192, 192, 12
    $region9: #{tpu_custom_call.1} parent=1 // pred_fallthru
      _
    // Predicated region
    $region10: #{tpu_custom_call.1} parent=1 // pred_check
      _
    $region11: #{tpu_custom_call.1} parent=1 // pred_check_branch
      %38 = sbr.rel (0) target = $region13
    $region12: #{tpu_custom_call.1} parent=1 // pred_region
      %40 = vsyncadd [#allocation6], 0
      %s42 = sshll.u32 %s2, 4
      %s43 = int_to_ptr.hbm [resolvable:$true] %s42
      %s44 = sshll.u32 [#allocation7], 4
      %s45 = int_to_ptr.vmem [resolvable:$true] %s44
      %47 = dma.hbm_to_vmem [thread:$0]  %s43, 48, %s45, [#allocation6]
    $region13: #{tpu_custom_call.1} parent=1 // pred_fallthru
      _
    // Predicated region
    $region14: #{tpu_custom_call.1} parent=1 // pred_check
      _
    $region15: #{tpu_custom_call.1} parent=1 // pred_check_branch
      %49 = sbr.rel (0) target = $region17
    $region16: #{tpu_custom_call.1} parent=1 // pred_region
      %51 = dma.done [#allocation3], 1024
    $region17: #{tpu_custom_call.1} parent=1 // pred_fallthru
      _
    // Predicated region
    $region18: #{tpu_custom_call.1} parent=1 // pred_check
      _
    $region19: #{tpu_custom_call.1} parent=1 // pred_check_branch
      %53 = sbr.rel (0) target = $region21
    $region20: #{tpu_custom_call.1} parent=1 // pred_region
      %55 = dma.done [#allocation6], 3072
    $region21: #{tpu_custom_call.1} parent=1 // pred_fallthru
      _
    // Predicated region
    $region22: #{tpu_custom_call.1} parent=1 // pred_check
      _
    $region23: #{tpu_custom_call.1} parent=1 // pred_check_branch
      %57 = sbr.rel (0) target = $region25
    $region24: #{tpu_custom_call.1} parent=1 // pred_region
      %59 = dma.done [#allocation6], 48
    $region25: #{tpu_custom_call.1} parent=1 // pred_fallthru
      _
    %v60 = vld [vmem:[#allocation2] sm:$0xf]
    %v61 = vld [vmem:[#allocation2 + $0x4] sm:$0xf]
    %v62 = vld [vmem:[#allocation2 + $0x8] sm:$0xf]
    %v63 = vld [vmem:[#allocation2 + $0xc] sm:$0xf]
    %v64 = vld [vmem:[#allocation2 + $0x10] sm:$0xf]
    %v65 = vld [vmem:[#allocation2 + $0x14] sm:$0xf]
    %v66 = vld [vmem:[#allocation2 + $0x18] sm:$0xf]
    %v67 = vld [vmem:[#allocation2 + $0x1c] sm:$0xf]
    %v68 = vld [vmem:[#allocation2 + $0x20] sm:$0xf]
    %v69 = vld [vmem:[#allocation2 + $0x24] sm:$0xf]
    %v70 = vld [vmem:[#allocation2 + $0x28] sm:$0xf]
    %v71 = vld [vmem:[#allocation2 + $0x2c] sm:$0xf]
    %v72 = vld [vmem:[#allocation2 + $0x30] sm:$0xf]
    %v73 = vld [vmem:[#allocation2 + $0x34] sm:$0xf]
    %v74 = vld [vmem:[#allocation2 + $0x38] sm:$0xf]
    %v75 = vld [vmem:[#allocation2 + $0x3c] sm:$0xf]
    %v76 = vld [vmem:[#allocation5] sm:$0xff]
    %v77 = vld [vmem:[#allocation5 + $0x8] sm:$0xf]
    %v78 = vld [vmem:[#allocation5 + $0xc] sm:$0xff]
    %v79 = vld [vmem:[#allocation5 + $0x14] sm:$0xf]
    %v80 = vld [vmem:[#allocation5 + $0x18] sm:$0xff]
    %v81 = vld [vmem:[#allocation5 + $0x20] sm:$0xf]
    %v82 = vld [vmem:[#allocation5 + $0x24] sm:$0xff]
    %v83 = vld [vmem:[#allocation5 + $0x2c] sm:$0xf]
    %v84 = vld [vmem:[#allocation5 + $0x30] sm:$0xff]
    %v85 = vld [vmem:[#allocation5 + $0x38] sm:$0xf]
    %v86 = vld [vmem:[#allocation5 + $0x3c] sm:$0xff]
    %v87 = vld [vmem:[#allocation5 + $0x44] sm:$0xf]
    %v88 = vld [vmem:[#allocation5 + $0x48] sm:$0xff]
    %v89 = vld [vmem:[#allocation5 + $0x50] sm:$0xf]
    %v90 = vld [vmem:[#allocation5 + $0x54] sm:$0xff]
    %v91 = vld [vmem:[#allocation5 + $0x5c] sm:$0xf]
    %v92 = vld [vmem:[#allocation5 + $0x60] sm:$0xff]
    %v93 = vld [vmem:[#allocation5 + $0x68] sm:$0xf]
    %v94 = vld [vmem:[#allocation5 + $0x6c] sm:$0xff]
    %v95 = vld [vmem:[#allocation5 + $0x74] sm:$0xf]
    %v96 = vld [vmem:[#allocation5 + $0x78] sm:$0xff]
    %v97 = vld [vmem:[#allocation5 + $0x80] sm:$0xf]
    %v98 = vld [vmem:[#allocation5 + $0x84] sm:$0xff]
    %v99 = vld [vmem:[#allocation5 + $0x8c] sm:$0xf]
    %v100 = vld [vmem:[#allocation5 + $0x90] sm:$0xff]
    %v101 = vld [vmem:[#allocation5 + $0x98] sm:$0xf]
    %v102 = vld [vmem:[#allocation5 + $0x9c] sm:$0xff]
    %v103 = vld [vmem:[#allocation5 + $0xa4] sm:$0xf]
    %v104 = vld [vmem:[#allocation5 + $0xa8] sm:$0xff]
    %v105 = vld [vmem:[#allocation5 + $0xb0] sm:$0xf]
    %v106 = vld [vmem:[#allocation5 + $0xb4] sm:$0xff]
    %v107 = vld [vmem:[#allocation5 + $0xbc] sm:$0xf]
    %v108 = vld [vmem:[#allocation7] sm:$0x7]
    %v110 = vperm.slane %v108, 0
    %v111 = vperm.slane %v108, 1
    %v112 = vperm.slane %v108, 2
    %v132 = vunpack.c.l.b16 %v60
    %v133 = vunpack.c.l.b16 %v61
    %v134 = vunpack.c.l.b16 %v62
    %v135 = vunpack.c.l.b16 %v63
    %v136 = vunpack.c.l.b16 %v64
    %v137 = vunpack.c.l.b16 %v65
    %v138 = vunpack.c.l.b16 %v66
    %v139 = vunpack.c.l.b16 %v67
    %v140 = vunpack.c.l.b16 %v68
    %v141 = vunpack.c.l.b16 %v69
    %v142 = vunpack.c.l.b16 %v70
    %v143 = vunpack.c.l.b16 %v71
    %v144 = vunpack.c.l.b16 %v72
    %v145 = vunpack.c.l.b16 %v73
    %v146 = vunpack.c.l.b16 %v74
    %v147 = vunpack.c.l.b16 %v75
    %v148 = vpack.c.b16 %v133, %v132
    %v149 = vpack.c.b16 %v135, %v134
    %v150 = vpack.c.b16 %v137, %v136
    %v151 = vpack.c.b16 %v139, %v138
    %v152 = vpack.c.b16 %v141, %v140
    %v153 = vpack.c.b16 %v143, %v142
    %v154 = vpack.c.b16 %v145, %v144
    %v155 = vpack.c.b16 %v147, %v146
    %v196 = vunpack.c.l.b16 %v76
    %v197 = vunpack.c.h.b16 %v76
    %v198 = vunpack.c.l.b16 %v77
    %v199 = vunpack.c.l.b16 %v78
    %v200 = vunpack.c.h.b16 %v78
    %v201 = vunpack.c.l.b16 %v79
    %v202 = vunpack.c.l.b16 %v80
    %v203 = vunpack.c.h.b16 %v80
    %v204 = vunpack.c.l.b16 %v81
    %v205 = vunpack.c.l.b16 %v82
    %v206 = vunpack.c.h.b16 %v82
    %v207 = vunpack.c.l.b16 %v83
    %v208 = vunpack.c.l.b16 %v84
    %v209 = vunpack.c.h.b16 %v84
    %v210 = vunpack.c.l.b16 %v85
    %v211 = vunpack.c.l.b16 %v86
    %v212 = vunpack.c.h.b16 %v86
    %v213 = vunpack.c.l.b16 %v87
    %v214 = vunpack.c.l.b16 %v88
    %v215 = vunpack.c.h.b16 %v88
    %v216 = vunpack.c.l.b16 %v89
    %v217 = vunpack.c.l.b16 %v90
    %v218 = vunpack.c.h.b16 %v90
    %v219 = vunpack.c.l.b16 %v91
    %v220 = vunpack.c.l.b16 %v92
    %v221 = vunpack.c.h.b16 %v92
    %v222 = vunpack.c.l.b16 %v93
    %v223 = vunpack.c.l.b16 %v94
    %v224 = vunpack.c.h.b16 %v94
    %v225 = vunpack.c.l.b16 %v95
    %v226 = vunpack.c.l.b16 %v96
    %v227 = vunpack.c.h.b16 %v96
    %v228 = vunpack.c.l.b16 %v97
    %v229 = vunpack.c.l.b16 %v98
    %v230 = vunpack.c.h.b16 %v98
    %v231 = vunpack.c.l.b16 %v99
    %v232 = vunpack.c.l.b16 %v100
    %v233 = vunpack.c.h.b16 %v100
    %v234 = vunpack.c.l.b16 %v101
    %v235 = vunpack.c.l.b16 %v102
    %v236 = vunpack.c.h.b16 %v102
    %v237 = vunpack.c.l.b16 %v103
    %v238 = vunpack.c.l.b16 %v104
    %v239 = vunpack.c.h.b16 %v104
    %v240 = vunpack.c.l.b16 %v105
    %v241 = vunpack.c.l.b16 %v106
    %v242 = vunpack.c.h.b16 %v106
    %v243 = vunpack.c.l.b16 %v107
    %v244 = vpack.c.b16 %v199, %v196
    %v245 = vpack.c.b16 %v200, %v197
    %v246 = vpack.c.b16 %v201, %v198
    %v247 = vpack.c.b16 %v205, %v202
    %v248 = vpack.c.b16 %v206, %v203
    %v249 = vpack.c.b16 %v207, %v204
    %v250 = vpack.c.b16 %v211, %v208
    %v251 = vpack.c.b16 %v212, %v209
    %v252 = vpack.c.b16 %v213, %v210
    %v253 = vpack.c.b16 %v217, %v214
    %v254 = vpack.c.b16 %v218, %v215
    %v255 = vpack.c.b16 %v219, %v216
    %v256 = vpack.c.b16 %v223, %v220
    %v257 = vpack.c.b16 %v224, %v221
    %v258 = vpack.c.b16 %v225, %v222
    %v259 = vpack.c.b16 %v229, %v226
    %v260 = vpack.c.b16 %v230, %v227
    %v261 = vpack.c.b16 %v231, %v228
    %v262 = vpack.c.b16 %v235, %v232
    %v263 = vpack.c.b16 %v236, %v233
    %v264 = vpack.c.b16 %v237, %v234
    %v265 = vpack.c.b16 %v241, %v238
    %v266 = vpack.c.b16 %v242, %v239
    %v267 = vpack.c.b16 %v243, %v240
    %292 = vmatpush.bf16.msra.mxu0 %v265
    %293 = vmatpush.bf16.msra.mxu0 %v262
    %294 = vmatpush.bf16.msra.mxu0 %v259
    %295 = vmatpush.bf16.msra.mxu0 %v256
    %296 = vmatpush.bf16.msra.mxu0 %v253
    %297 = vmatpush.bf16.msra.mxu0 %v250
    %298 = vmatpush.bf16.msra.mxu0 %v247
    %299 = vmatpush.bf16.msra.mxu0 %v244
    %300 = vmatmul.bf16.gmra.mxu0 %v148
    %v301 = vpop.f32.mrf.mxu0
    %v302 = vadd.f32 %v110, %v301
    %v303 = vpop.f32.mrf.mxu0
    %v304 = vadd.f32 %v110, %v303
    %305 = vmatmul.bf16.gmra.mxu0 %v149
    %v306 = vpop.f32.mrf.mxu0
    %v307 = vadd.f32 %v110, %v306
    %v308 = vpop.f32.mrf.mxu0
    %v309 = vadd.f32 %v110, %v308
    %310 = vmatmul.bf16.gmra.mxu0 %v150
    %v311 = vpop.f32.mrf.mxu0
    %v312 = vadd.f32 %v110, %v311
    %v313 = vpop.f32.mrf.mxu0
    %v314 = vadd.f32 %v110, %v313
    %315 = vmatmul.bf16.gmra.mxu0 %v151
    %v316 = vpop.f32.mrf.mxu0
    %v317 = vadd.f32 %v110, %v316
    %v318 = vpop.f32.mrf.mxu0
    %v319 = vadd.f32 %v110, %v318
    %320 = vmatmul.bf16.gmra.mxu0 %v152
    %v321 = vpop.f32.mrf.mxu0
    %v322 = vadd.f32 %v110, %v321
    %v323 = vpop.f32.mrf.mxu0
    %v324 = vadd.f32 %v110, %v323
    %325 = vmatmul.bf16.gmra.mxu0 %v153
    %v326 = vpop.f32.mrf.mxu0
    %v327 = vadd.f32 %v110, %v326
    %v328 = vpop.f32.mrf.mxu0
    %v329 = vadd.f32 %v110, %v328
    %330 = vmatmul.bf16.gmra.mxu0 %v154
    %v331 = vpop.f32.mrf.mxu0
    %v332 = vadd.f32 %v110, %v331
    %v333 = vpop.f32.mrf.mxu0
    %v334 = vadd.f32 %v110, %v333
    %335 = vmatmul.bf16.gmra.mxu0 %v155
    %v336 = vpop.f32.mrf.mxu0
    %v337 = vadd.f32 %v110, %v336
    %v338 = vpop.f32.mrf.mxu0
    %v339 = vadd.f32 %v110, %v338
    %340 = vdwg.mxu0
    %341 = vmatpush.bf16.msra.mxu0 %v266
    %342 = vmatpush.bf16.msra.mxu0 %v263
    %343 = vmatpush.bf16.msra.mxu0 %v260
    %344 = vmatpush.bf16.msra.mxu0 %v257
    %345 = vmatpush.bf16.msra.mxu0 %v254
    %346 = vmatpush.bf16.msra.mxu0 %v251
    %347 = vmatpush.bf16.msra.mxu0 %v248
    %348 = vmatpush.bf16.msra.mxu0 %v245
    %349 = vmatmul.bf16.gmra.mxu0 %v148
    %v350 = vpop.f32.mrf.mxu0
    %v351 = vadd.f32 %v111, %v350
    %v352 = vpop.f32.mrf.mxu0
    %v353 = vadd.f32 %v111, %v352
    %354 = vmatmul.bf16.gmra.mxu0 %v149
    %v355 = vpop.f32.mrf.mxu0
    %v356 = vadd.f32 %v111, %v355
    %v357 = vpop.f32.mrf.mxu0
    %v358 = vadd.f32 %v111, %v357
    %359 = vmatmul.bf16.gmra.mxu0 %v150
    %v360 = vpop.f32.mrf.mxu0
    %v361 = vadd.f32 %v111, %v360
    %v362 = vpop.f32.mrf.mxu0
    %v363 = vadd.f32 %v111, %v362
    %364 = vmatmul.bf16.gmra.mxu0 %v151
    %v365 = vpop.f32.mrf.mxu0
    %v366 = vadd.f32 %v111, %v365
    %v367 = vpop.f32.mrf.mxu0
    %v368 = vadd.f32 %v111, %v367
    %369 = vmatmul.bf16.gmra.mxu0 %v152
    %v370 = vpop.f32.mrf.mxu0
    %v371 = vadd.f32 %v111, %v370
    %v372 = vpop.f32.mrf.mxu0
    %v373 = vadd.f32 %v111, %v372
    %374 = vmatmul.bf16.gmra.mxu0 %v153
    %v375 = vpop.f32.mrf.mxu0
    %v376 = vadd.f32 %v111, %v375
    %v377 = vpop.f32.mrf.mxu0
    %v378 = vadd.f32 %v111, %v377
    %379 = vmatmul.bf16.gmra.mxu0 %v154
    %v380 = vpop.f32.mrf.mxu0
    %v381 = vadd.f32 %v111, %v380
    %v382 = vpop.f32.mrf.mxu0
    %v383 = vadd.f32 %v111, %v382
    %384 = vmatmul.bf16.gmra.mxu0 %v155
    %v385 = vpop.f32.mrf.mxu0
    %v386 = vadd.f32 %v111, %v385
    %v387 = vpop.f32.mrf.mxu0
    %v388 = vadd.f32 %v111, %v387
    %389 = vdwg.mxu0
    %390 = vmatpush.bf16.msra.mxu0 %v267
    %391 = vmatpush.bf16.msra.mxu0 %v264
    %392 = vmatpush.bf16.msra.mxu0 %v261
    %393 = vmatpush.bf16.msra.mxu0 %v258
    %394 = vmatpush.bf16.msra.mxu0 %v255
    %395 = vmatpush.bf16.msra.mxu0 %v252
    %396 = vmatpush.bf16.msra.mxu0 %v249
    %397 = vmatpush.bf16.msra.mxu0 %v246
    %398 = vmatmul.bf16.gmra.mxu0 %v148
    %v399 = vpop.f32.mrf.mxu0
    %v400 = vadd.f32 %v112, %v399
    %v401 = vpop.f32.mrf.mxu0
    %v402 = vadd.f32 %v112, %v401
    %403 = vmatmul.bf16.gmra.mxu0 %v149
    %v404 = vpop.f32.mrf.mxu0
    %v405 = vadd.f32 %v112, %v404
    %v406 = vpop.f32.mrf.mxu0
    %v407 = vadd.f32 %v112, %v406
    %408 = vmatmul.bf16.gmra.mxu0 %v150
    %v409 = vpop.f32.mrf.mxu0
    %v410 = vadd.f32 %v112, %v409
    %v411 = vpop.f32.mrf.mxu0
    %v412 = vadd.f32 %v112, %v411
    %413 = vmatmul.bf16.gmra.mxu0 %v151
    %v414 = vpop.f32.mrf.mxu0
    %v415 = vadd.f32 %v112, %v414
    %v416 = vpop.f32.mrf.mxu0
    %v417 = vadd.f32 %v112, %v416
    %418 = vmatmul.bf16.gmra.mxu0 %v152
    %v419 = vpop.f32.mrf.mxu0
    %v420 = vadd.f32 %v112, %v419
    %v421 = vpop.f32.mrf.mxu0
    %v422 = vadd.f32 %v112, %v421
    %423 = vmatmul.bf16.gmra.mxu0 %v153
    %v424 = vpop.f32.mrf.mxu0
    %v425 = vadd.f32 %v112, %v424
    %v426 = vpop.f32.mrf.mxu0
    %v427 = vadd.f32 %v112, %v426
    %428 = vmatmul.bf16.gmra.mxu0 %v154
    %v429 = vpop.f32.mrf.mxu0
    %v430 = vadd.f32 %v112, %v429
    %v431 = vpop.f32.mrf.mxu0
    %v432 = vadd.f32 %v112, %v431
    %433 = vmatmul.bf16.gmra.mxu0 %v155
    %v434 = vpop.f32.mrf.mxu0
    %v435 = vadd.f32 %v112, %v434
    %v436 = vpop.f32.mrf.mxu0
    %v437 = vadd.f32 %v112, %v436
    %438 = vdwg.mxu0
    %v439 = vpack.c.bf16 %v351, %v302
    %v440 = vpack.c.bf16 %v400, %v400
    %v441 = vpack.c.bf16 %v353, %v304
    %v442 = vpack.c.bf16 %v402, %v402
    %v443 = vpack.c.bf16 %v356, %v307
    %v444 = vpack.c.bf16 %v405, %v405
    %v445 = vpack.c.bf16 %v358, %v309
    %v446 = vpack.c.bf16 %v407, %v407
    %v447 = vpack.c.bf16 %v361, %v312
    %v448 = vpack.c.bf16 %v410, %v410
    %v449 = vpack.c.bf16 %v363, %v314
    %v450 = vpack.c.bf16 %v412, %v412
    %v451 = vpack.c.bf16 %v366, %v317
    %v452 = vpack.c.bf16 %v415, %v415
    %v453 = vpack.c.bf16 %v368, %v319
    %v454 = vpack.c.bf16 %v417, %v417
    %v455 = vpack.c.bf16 %v371, %v322
    %v456 = vpack.c.bf16 %v420, %v420
    %v457 = vpack.c.bf16 %v373, %v324
    %v458 = vpack.c.bf16 %v422, %v422
    %v459 = vpack.c.bf16 %v376, %v327
    %v460 = vpack.c.bf16 %v425, %v425
    %v461 = vpack.c.bf16 %v378, %v329
    %v462 = vpack.c.bf16 %v427, %v427
    %v463 = vpack.c.bf16 %v381, %v332
    %v464 = vpack.c.bf16 %v430, %v430
    %v465 = vpack.c.bf16 %v383, %v334
    %v466 = vpack.c.bf16 %v432, %v432
    %v467 = vpack.c.bf16 %v386, %v337
    %v468 = vpack.c.bf16 %v435, %v435
    %v469 = vpack.c.bf16 %v388, %v339
    %v470 = vpack.c.bf16 %v437, %v437
    %471 = vst [vmem:[#allocation8] sm:$0xff] %v439
    %472 = vst [vmem:[#allocation8 + $0x8] sm:$0xf] %v440
    %473 = vst [vmem:[#allocation8 + $0xc] sm:$0xff] %v441
    %474 = vst [vmem:[#allocation8 + $0x14] sm:$0xf] %v442
    %475 = vst [vmem:[#allocation8 + $0x18] sm:$0xff] %v443
    %476 = vst [vmem:[#allocation8 + $0x20] sm:$0xf] %v444
    %477 = vst [vmem:[#allocation8 + $0x24] sm:$0xff] %v445
    %478 = vst [vmem:[#allocation8 + $0x2c] sm:$0xf] %v446
    %479 = vst [vmem:[#allocation8 + $0x30] sm:$0xff] %v447
    %480 = vst [vmem:[#allocation8 + $0x38] sm:$0xf] %v448
    %481 = vst [vmem:[#allocation8 + $0x3c] sm:$0xff] %v449
    %482 = vst [vmem:[#allocation8 + $0x44] sm:$0xf] %v450
    %483 = vst [vmem:[#allocation8 + $0x48] sm:$0xff] %v451
    %484 = vst [vmem:[#allocation8 + $0x50] sm:$0xf] %v452
    %485 = vst [vmem:[#allocation8 + $0x54] sm:$0xff] %v453
    %486 = vst [vmem:[#allocation8 + $0x5c] sm:$0xf] %v454
    %487 = vst [vmem:[#allocation8 + $0x60] sm:$0xff] %v455
    %488 = vst [vmem:[#allocation8 + $0x68] sm:$0xf] %v456
    %489 = vst [vmem:[#allocation8 + $0x6c] sm:$0xff] %v457
    %490 = vst [vmem:[#allocation8 + $0x74] sm:$0xf] %v458
    %491 = vst [vmem:[#allocation8 + $0x78] sm:$0xff] %v459
    %492 = vst [vmem:[#allocation8 + $0x80] sm:$0xf] %v460
    %493 = vst [vmem:[#allocation8 + $0x84] sm:$0xff] %v461
    %494 = vst [vmem:[#allocation8 + $0x8c] sm:$0xf] %v462
    %495 = vst [vmem:[#allocation8 + $0x90] sm:$0xff] %v463
    %496 = vst [vmem:[#allocation8 + $0x98] sm:$0xf] %v464
    %497 = vst [vmem:[#allocation8 + $0x9c] sm:$0xff] %v465
    %498 = vst [vmem:[#allocation8 + $0xa4] sm:$0xf] %v466
    %499 = vst [vmem:[#allocation8 + $0xa8] sm:$0xff] %v467
    %500 = vst [vmem:[#allocation8 + $0xb0] sm:$0xf] %v468
    %501 = vst [vmem:[#allocation8 + $0xb4] sm:$0xff] %v469
    %502 = vst [vmem:[#allocation8 + $0xbc] sm:$0xf] %v470
    // Predicated region
    $region26: #{tpu_custom_call.1} parent=1 // pred_check
      _
    $region27: #{tpu_custom_call.1} parent=1 // pred_check_branch
      %504 = sbr.rel (0) target = $region29
    $region28: #{tpu_custom_call.1} parent=1 // pred_region
      %506 = vsyncadd [#allocation4], 0
      %s507 = sshll.u32 [#allocation8], 4
      %s508 = int_to_ptr.vmem [resolvable:$true] %s507
      %s509 = sshll.u32 %s3, 4
      %s510 = int_to_ptr.hbm [resolvable:$true] %s509
      %515 = dma.vmem_to_hbm [thread:$0]  %s508, 3072, %s510, [#allocation4], 192, 192, 12
    $region29: #{tpu_custom_call.1} parent=1 // pred_fallthru
      _
    // Predicated region
    $region30: #{tpu_custom_call.1} parent=1 // pred_check
      _
    $region31: #{tpu_custom_call.1} parent=1 // pred_check_branch
      %517 = sbr.rel (0) target = $region33
    $region32: #{tpu_custom_call.1} parent=1 // pred_region
      %519 = dma.done [#allocation4], 3072
    $region33: #{tpu_custom_call.1} parent=1 // pred_fallthru
      _
    %520 = vsyncpa [#allocation3], 1
    %521 = vsyncpa [#allocation6], 1
    %522 = vsyncpa [#allocation4], 1

</llo_original>
